<compile_context>
chip_gen: v7x
topology: tpu7x:2x2x1
jax: 0.10.0
libtpu: 0.0.40
codegen_flags: <defaults>
</compile_context>

<pallas_src>
import jax
import jax.numpy as jnp
import numpy as np
from jax.experimental import pallas as pl
from jax.experimental.pallas import tpu as pltpu

IN_DIM = 16   # N  (node count)
HIDDEN = 32   # H  (GRU hidden size)
BATCH = 2


# ---------------------------------------------------------------- kernel ----
def _attgru_kernel(x_ref, h_ref, adjT_ref, wh_ref, extras_ref, out_ref):
    H = out_ref.shape[-1]

    h = h_ref[...]                                   # (BN, H)  previous state
    x_col = x_ref[...]                               # (BN, 1)  input column

    w_x = extras_ref[0:1, :]                         # (1, 4H) x-row of fused weights
    b_g = extras_ref[1:2, :]                         # (1, 4H) gate biases (e2 slot = 0)
    b_e2 = extras_ref[2:3, 0:H]                      # (1, H)  embed_layer2 bias

    # Fused 4-way projection (e2 | hr | hz | hn):
    # aligned K=H MXU matmul + rank-1 VPU update for the x column.
    proj = (jnp.dot(h, wh_ref[...], preferred_element_type=jnp.float32)
            + x_col * w_x + b_g)                     # (BN, 4H)

    e2 = proj[:, 0 * H:1 * H]        # conc @ W_e2^T   (bias added after aggregate)
    hr = proj[:, 1 * H:2 * H]        # W_hr(conc)
    hz = proj[:, 2 * H:3 * H]        # W_hz(conc)
    hn = proj[:, 3 * H:4 * H]        # W_hn(conc)

    # Graph-attention aggregate, re-associated:
    #   (adj^T @ conc) @ We2^T == adj^T @ (conc @ We2^T).
    # adjT_ref already holds the transposed block-diagonal adjacency, so this is
    # a plain (BN, BN) x (BN, H) MXU contraction.
    gc = jnp.dot(adjT_ref[...], e2, preferred_element_type=jnp.float32) + b_e2

    # _gc_aggregate ignores weight_idx in the reference, so gc is shared by r/z/n.
    r = jax.nn.sigmoid(gc + hr)
    z = jax.nn.sigmoid(gc + hz)
    n = jnp.tanh(gc + r * hn)
    out_ref[...] = (1.0 - z) * n + z * h


# --------------------------------------------------------------- wrapper ----
def fuse_params(params):
    """One-time fusion of the four Linear layers into MXU-friendly slabs."""
    H = params["W_hr"].shape[0]
    # (H+1, 4H) fused weights; row 0 acts on the x column, rows 1.. act on h.
    w_all = jnp.concatenate(
        [params["W_e2"].T, params["W_hr"].T, params["W_hz"].T, params["W_hn"].T],
        axis=1)
    w_h = w_all[1:, :]                               # (H, 4H)
    w_x = w_all[0:1, :]                              # (1, 4H)
    # embed_layer2's bias must be added AFTER the adj aggregate (reference
    # semantics) → its slot in the fused gate bias is zero; b_e2 rides in row 2.
    b_g = jnp.concatenate(
        [jnp.zeros((H,), jnp.float32),
         params["b_hr"], params["b_hz"], params["b_hn"]]).reshape(1, 4 * H)
    b_e2 = jnp.concatenate(
        [params["b_e2"], jnp.zeros((3 * H,), jnp.float32)]).reshape(1, 4 * H)
    extras = jnp.concatenate([w_x, b_g, b_e2], axis=0)   # (3, 4H)
    return {"w_h": w_h, "extras": extras}


@jax.jit
def _att_gru_step(x, h_flat, adj, w_h, extras):
    B, N = x.shape
    H = w_h.shape[0]
    BN = B * N

    x_col = x.reshape(BN, 1)
    h2d = h_flat.reshape(BN, H)

    # Block-diagonal, PRE-transposed adjacency:
    #   adjT_bd[(b,i),(b,j)] = adj[b,j,i]   (zero across batches)
    # so a plain adjT_bd @ e2 reproduces the per-batch adj^T @ (.) aggregate.
    # TODO(synk): for large B*N replace with a batched dot (O(B*N^2) instead of
    # O(B^2*N^2)); fine at BN=32.
    adjT_bd = jnp.einsum("bc,bji->bicj",
                         jnp.eye(B, dtype=adj.dtype), adj).reshape(BN, BN)

    out = pl.pallas_call(
        _attgru_kernel,
        out_shape=jax.ShapeDtypeStruct((BN, H), jnp.float32),
        in_specs=[
            pl.BlockSpec(memory_space=pltpu.MemorySpace.VMEM),   # x_col  (BN, 1)
            pl.BlockSpec(memory_space=pltpu.MemorySpace.VMEM),   # h      (BN, H)
            pl.BlockSpec(memory_space=pltpu.MemorySpace.VMEM),   # adjT   (BN, BN)
            pl.BlockSpec(memory_space=pltpu.MemorySpace.VMEM),   # w_h    (H, 4H)
            pl.BlockSpec(memory_space=pltpu.MemorySpace.VMEM),   # extras (3, 4H)
        ],
        out_specs=pl.BlockSpec(memory_space=pltpu.MemorySpace.VMEM),
    )(x_col, h2d, adjT_bd, w_h, extras)
    return out.reshape(B, N, H)


def att_gru_cell(x, h_flat, adj, adj_d, x_d, fused):
    """x: (B, N), h_flat: (B, N*H), adj/adj_d: (B, N, N), x_d: (..., N).

    adj_d and x_d are accepted for signature parity with the PyTorch forward but
    are unused there: delay_conv(x_d) is computed and immediately discarded and
    adj_d never feeds the output — so we skip both entirely (per review).
    """
    del adj_d, x_d
    return _att_gru_step(x, h_flat, adj, fused["w_h"], fused["extras"])


# --------------------------------------------------------- params / ref -----
def init_params(key, in_dim, hidden):
    """Deterministic PyTorch-Linear-style init (uniform +-1/sqrt(fan_in))."""
    def linear(k, out_f, in_f):
        kw, kb = jax.random.split(k)
        bound = 1.0 / np.sqrt(in_f)
        W = jax.random.uniform(kw, (out_f, in_f), jnp.float32, -bound, bound)
        b = jax.random.uniform(kb, (out_f,), jnp.float32, -bound, bound)
        return W, b

    ks = jax.random.split(key, 5)
    W_e2, b_e2 = linear(ks[0], hidden, hidden + 1)   # embed_layer2
    W_hr, b_hr = linear(ks[1], hidden, hidden + 1)
    W_hz, b_hz = linear(ks[2], hidden, hidden + 1)
    W_hn, b_hn = linear(ks[3], hidden, hidden + 1)
    dW, db = linear(ks[4], 1, in_dim)                # delay_conv (dead in forward)
    # W_ir/W_iz/W_in, embed_layer1, softmax and `weigh` are never used in
    # forward -> omitted.
    return dict(W_e2=W_e2, b_e2=b_e2, W_hr=W_hr, b_hr=b_hr,
                W_hz=W_hz, b_hz=b_hz, W_hn=W_hn, b_hn=b_hn,
                delay_w=dW, delay_b=db)


def att_gru_ref(x, h_flat, adj, params):
    """Pure-JAX reference mirroring the PyTorch forward (no re-association)."""
    B, N = x.shape
    H = params["W_hr"].shape[0]
    h = h_flat.reshape(B, N, H)
    conc = jnp.concatenate([x[..., None], h], axis=-1)                 # (B, N, H+1)
    agg = jnp.einsum("bji,bjf->bif", adj, conc)                        # adj^T @ conc
    gc = agg @ params["W_e2"].T + params["b_e2"]
    hr = conc @ params["W_hr"].T + params["b_hr"]
    hz = conc @ params["W_hz"].T + params["b_hz"]
    hn = conc @ params["W_hn"].T + params["b_hn"]
    r = jax.nn.sigmoid(gc + hr)
    z = jax.nn.sigmoid(gc + hz)
    n = jnp.tanh(gc + r * hn)
    return (1.0 - z) * n + z * h


# ------------------------------------------------------------------ main ----
if __name__ == "__main__":
    key = jax.random.PRNGKey(0)
    k = jax.random.split(key, 6)
    params = init_params(k[0], IN_DIM, HIDDEN)
    fused = fuse_params(params)            # one-time weight fusion (hoisted)

    x      = jax.random.normal(k[1], (BATCH, IN_DIM), jnp.float32)
    h_flat = jax.random.normal(k[2], (BATCH, IN_DIM * HIDDEN), jnp.float32)
    adj    = jax.random.uniform(k[3], (BATCH, IN_DIM, IN_DIM), jnp.float32)
    adj_d  = jax.random.uniform(k[4], (BATCH, IN_DIM, IN_DIM), jnp.float32)
    x_d    = jax.random.normal(k[5], (BATCH, IN_DIM, IN_DIM), jnp.float32)

    out = att_gru_cell(x, h_flat, adj, adj_d, x_d, fused)
    out = jax.block_until_ready(out)

    ref = att_gru_ref(x, h_flat, adj, params)
    # Slightly relaxed vs 1e-5: the kernel re-associates the gc matmul chain and
    # splits the x column out of the K-contraction, which legitimately perturbs
    # f32 summation order.
    np.testing.assert_allclose(np.asarray(out), np.asarray(ref),
                               rtol=5e-5, atol=5e-5)
    print("KERNEL_OK")
</pallas_src>

<mosaic_0001>
module attributes {stable_mosaic.version = 11 : i64} {
  func.func @_attgru_kernel(%arg0: memref<32x1xf32, #tpu.memory_space<vmem>>, %arg1: memref<32x32xf32, #tpu.memory_space<vmem>>, %arg2: memref<32x32xf32, #tpu.memory_space<vmem>>, %arg3: memref<32x128xf32, #tpu.memory_space<vmem>>, %arg4: memref<3x128xf32, #tpu.memory_space<vmem>>, %arg5: memref<32x32xf32, #tpu.memory_space<vmem>>) attributes {dimension_semantics = [], scalar_prefetch = 0 : i64, scratch_operands = 0 : i64, tpu.core_type = #tpu.core_type<tc>} {
    %c0 = arith.constant 0 : index
    %c0_0 = arith.constant 0 : index
    %0 = vector.load %arg1[%c0, %c0_0] : memref<32x32xf32, #tpu.memory_space<vmem>>, vector<32x32xf32>
    %c0_1 = arith.constant 0 : index
    %c0_2 = arith.constant 0 : index
    %1 = vector.load %arg0[%c0_1, %c0_2] : memref<32x1xf32, #tpu.memory_space<vmem>>, vector<32x1xf32>
    %c0_3 = arith.constant 0 : index
    %c0_4 = arith.constant 0 : index
    %2 = vector.load %arg4[%c0_3, %c0_4] : memref<3x128xf32, #tpu.memory_space<vmem>>, vector<1x128xf32>
    %c1 = arith.constant 1 : index
    %c0_5 = arith.constant 0 : index
    %3 = vector.load %arg4[%c1, %c0_5] : memref<3x128xf32, #tpu.memory_space<vmem>>, vector<1x128xf32>
    %c2 = arith.constant 2 : index
    %c0_6 = arith.constant 0 : index
    %4 = vector.load %arg4[%c2, %c0_6] : memref<3x128xf32, #tpu.memory_space<vmem>>, vector<1x32xf32>
    %c0_7 = arith.constant 0 : index
    %c0_8 = arith.constant 0 : index
    %5 = vector.load %arg3[%c0_7, %c0_8] : memref<32x128xf32, #tpu.memory_space<vmem>>, vector<32x128xf32>
    %cst = arith.constant dense<0.000000e+00> : vector<32x128xf32>
    %6 = tpu.matmul %0, %5, %cst {dimension_numbers = #tpu.dot_dimension_numbers<[1], [0], [0], [1], [0, 0, 1, 1], [], []>} : vector<32x32xf32>, vector<32x128xf32>, vector<32x128xf32> -> vector<32x128xf32>
    %7 = vector.broadcast %1 : vector<32x1xf32> to vector<32x128xf32>
    %8 = vector.broadcast %2 : vector<1x128xf32> to vector<32x128xf32>
    %9 = arith.mulf %7, %8 : vector<32x128xf32>
    %10 = arith.addf %6, %9 : vector<32x128xf32>
    %11 = vector.broadcast %3 : vector<1x128xf32> to vector<32x128xf32>
    %12 = arith.addf %10, %11 : vector<32x128xf32>
    %13 = vector.extract_strided_slice %12 {offsets = [0, 0], sizes = [32, 32], strides = [1, 1]} : vector<32x128xf32> to vector<32x32xf32>
    %14 = vector.extract_strided_slice %12 {offsets = [0, 32], sizes = [32, 32], strides = [1, 1]} : vector<32x128xf32> to vector<32x32xf32>
    %15 = vector.extract_strided_slice %12 {offsets = [0, 64], sizes = [32, 32], strides = [1, 1]} : vector<32x128xf32> to vector<32x32xf32>
    %16 = vector.extract_strided_slice %12 {offsets = [0, 96], sizes = [32, 32], strides = [1, 1]} : vector<32x128xf32> to vector<32x32xf32>
    %c0_9 = arith.constant 0 : index
    %c0_10 = arith.constant 0 : index
    %17 = vector.load %arg2[%c0_9, %c0_10] : memref<32x32xf32, #tpu.memory_space<vmem>>, vector<32x32xf32>
    %cst_11 = arith.constant dense<0.000000e+00> : vector<32x32xf32>
    %18 = tpu.matmul %17, %13, %cst_11 {dimension_numbers = #tpu.dot_dimension_numbers<[1], [0], [0], [1], [0, 0, 1, 1], [], []>} : vector<32x32xf32>, vector<32x32xf32>, vector<32x32xf32> -> vector<32x32xf32>
    %19 = vector.broadcast %4 : vector<1x32xf32> to vector<32x32xf32>
    %20 = arith.addf %18, %19 : vector<32x32xf32>
    %21 = arith.addf %20, %14 : vector<32x32xf32>
    %22 = arith.negf %21 : vector<32x32xf32>
    %23 = math.exp %22 : vector<32x32xf32>
    %cst_12 = arith.constant 1.000000e+00 : f32
    %24 = vector.broadcast %cst_12 : f32 to vector<32x32xf32>
    %25 = arith.addf %24, %23 : vector<32x32xf32>
    %26 = arith.divf %24, %25 : vector<32x32xf32>
    %27 = arith.addf %20, %15 : vector<32x32xf32>
    %28 = arith.negf %27 : vector<32x32xf32>
    %29 = math.exp %28 : vector<32x32xf32>
    %cst_13 = arith.constant 1.000000e+00 : f32
    %30 = vector.broadcast %cst_13 : f32 to vector<32x32xf32>
    %31 = arith.addf %30, %29 : vector<32x32xf32>
    %32 = arith.divf %30, %31 : vector<32x32xf32>
    %33 = arith.mulf %26, %16 : vector<32x32xf32>
    %34 = arith.addf %20, %33 : vector<32x32xf32>
    %35 = math.tanh %34 : vector<32x32xf32>
    %cst_14 = arith.constant 1.000000e+00 : f32
    %36 = vector.broadcast %cst_14 : f32 to vector<32x32xf32>
    %37 = arith.subf %36, %32 : vector<32x32xf32>
    %38 = arith.mulf %37, %35 : vector<32x32xf32>
    %39 = arith.mulf %32, %0 : vector<32x32xf32>
    %40 = arith.addf %38, %39 : vector<32x32xf32>
    %c0_15 = arith.constant 0 : index
    %c0_16 = arith.constant 0 : index
    %41 = vector.load %arg5[%c0_15, %c0_16] : memref<32x32xf32, #tpu.memory_space<vmem>>, vector<32x32xf32>
    tpu.vector_store %arg5[%c0_15, %c0_16], %40 {strides = array<i32>} : memref<32x32xf32, #tpu.memory_space<vmem>>, vector<32x32xf32>,
    return
  }
}

</mosaic_0001>

<llo_original>
// kernel: _att_gru_step.1
$region0: #{_att_gru_step.1}
  #allocation0 [shape = 'u32[]', space=smem, size = 0x4, offset = 0x4, fixed_abs, tag = 'smem constant byte address 0x4 - core index']
  #allocation1 [shape = 'u32[144,128]{1,0:T(1,128)}', space=vmem, size = 0x12000, scoped, tag = 'internal scratch']
  %s0 = inlined_call_operand.vmem [shape: f32[32,1], index: 0, kind: input, shape index: {}]
  %s1 = inlined_call_operand.vmem [shape: f32[32,32], index: 1, kind: input, shape index: {}]
  %s2 = inlined_call_operand.vmem [shape: f32[32,32], index: 2, kind: input, shape index: {}]
  %s3 = inlined_call_operand.vmem [shape: f32[32,128], index: 3, kind: input, shape index: {}]
  %s4 = inlined_call_operand.vmem [shape: f32[3,128], index: 4, kind: input, shape index: {}]
  %s5 = inlined_call_operand.hbm [shape: f32[32,32], index: 5, kind: output, shape index: {}]
  %s6 = sld [smem:[#allocation0]]
  $region30: #{_att_gru_step.1} parent=0
    _
  %s8 = ssub.s32 1, %s6
  %s9 = scalar_select 0, %s8, %s6
  $region1: #{_att_gru_step.1} parent=0
    #allocation2 [shape = 'u8[16384]{0}', space=vmem, size = 0x4000, scoped, tag = 'output window, operand 0, single buffered']
    #allocation3 [shape = 's32[1]{0}', space=sflag, size = 0x4, scoped, tag = 'scoped memory for _att_gru_step.1']
    %10 = vsyncpa [#allocation3], 0
    // Predicated region
    $region2: #{_att_gru_step.1} parent=1 // pred_check
      _
    $region3: #{_att_gru_step.1} parent=1 // pred_check_branch
      %12 = sbr.rel (0) target = $region5
    $region4: #{_att_gru_step.1} parent=1 // pred_region
      _
    $region5: #{_att_gru_step.1} parent=1 // pred_fallthru
      _
    // Predicated region
    $region6: #{_att_gru_step.1} parent=1 // pred_check
      _
    $region7: #{_att_gru_step.1} parent=1 // pred_check_branch
      %14 = sbr.rel (0) target = $region9
    $region8: #{_att_gru_step.1} parent=1 // pred_region
      _
    $region9: #{_att_gru_step.1} parent=1 // pred_fallthru
      _
    // Predicated region
    $region10: #{_att_gru_step.1} parent=1 // pred_check
      _
    $region11: #{_att_gru_step.1} parent=1 // pred_check_branch
      %16 = sbr.rel (0) target = $region13
    $region12: #{_att_gru_step.1} parent=1 // pred_region
      _
    $region13: #{_att_gru_step.1} parent=1 // pred_fallthru
      _
    // Predicated region
    $region14: #{_att_gru_step.1} parent=1 // pred_check
      _
    $region15: #{_att_gru_step.1} parent=1 // pred_check_branch
      %18 = sbr.rel (0) target = $region17
    $region16: #{_att_gru_step.1} parent=1 // pred_region
      _
    $region17: #{_att_gru_step.1} parent=1 // pred_fallthru
      _
    // Predicated region
    $region18: #{_att_gru_step.1} parent=1 // pred_check
      _
    $region19: #{_att_gru_step.1} parent=1 // pred_check_branch
      %20 = sbr.rel (0) target = $region21
    $region20: #{_att_gru_step.1} parent=1 // pred_region
      _
    $region21: #{_att_gru_step.1} parent=1 // pred_fallthru
      _
    %v21 = vld [vmem:[%s1] sm:$0xff]
    %v22 = vld [vmem:[%s1 + $0x8] sm:$0xff]
    %v23 = vld [vmem:[%s1 + $0x10] sm:$0xff]
    %v24 = vld [vmem:[%s1 + $0x18] sm:$0xff]
    %v25 = vld [vmem:[%s0] sm:$0xff]
    %v26 = vld [vmem:[%s0 + $0x8] sm:$0xff]
    %v27 = vld [vmem:[%s0 + $0x10] sm:$0xff]
    %v28 = vld [vmem:[%s0 + $0x18] sm:$0xff]
    %v29 = vld [vmem:[%s4] sm:$0x1]
    %v30 = vld [vmem:[%s4 + $0x1] sm:$0x1]
    %v31 = vld [vmem:[%s4 + $0x2] sm:$0x1]
    %v32 = vld [vmem:[%s3] sm:$0xff]
    %v33 = vld [vmem:[%s3 + $0x8] sm:$0xff]
    %v34 = vld [vmem:[%s3 + $0x10] sm:$0xff]
    %v35 = vld [vmem:[%s3 + $0x18] sm:$0xff]
    %37 = vset.pattern.permute.xlu0 0
    %38 = vperm.xlu0 %37, %v25
    %v39 = vpop.permute.xlu0 %38
    %42 = vset.pattern.permute.xlu0 0
    %43 = vperm.xlu0 %42, %v26
    %v44 = vpop.permute.xlu0 %43
    %47 = vset.pattern.permute.xlu0 0
    %48 = vperm.xlu0 %47, %v27
    %v49 = vpop.permute.xlu0 %48
    %52 = vset.pattern.permute.xlu0 0
    %53 = vperm.xlu0 %52, %v28
    %v54 = vpop.permute.xlu0 %53
    %v56 = vlaneseq
    %v57 = vshrl.u32 %v56, 7
    %v58 = vsub.s32 0, %v57
    %v59 = vrot.slane %v29, %v58
    %v60 = vmul.f32 %v39, %v59
    %v61 = vmul.f32 %v44, %v59
    %v62 = vmul.f32 %v49, %v59
    %v63 = vmul.f32 %v54, %v59
    %vm64 = vcmask 261120
    %v66 = vsel %vm64, %v21, 0
    %v69 = vsel %vm64, %v22, 0
    %v72 = vsel %vm64, %v23, 0
    %v75 = vsel %vm64, %v24, 0
    %77 = vmatprep.subr.mxu0 0.0
    %78 = vmatpush1.msra.mxu0 %v32
    %79 = vmatprep.subr.mxu0 0.0
    %80 = vmatpush1.msra.mxu0 %v33
    %81 = vmatprep.subr.mxu0 0.0
    %82 = vmatpush1.msra.mxu0 %v34
    %83 = vmatprep.subr.mxu0 0.0
    %84 = vmatpush1.msra.mxu0 %v35
    %85 = vmatprep.subr.mxu0 0.0
    %86 = vmatpush1.msra.mxu0 0.0
    %87 = vmatprep.subr.mxu0 0.0
    %88 = vmatpush1.msra.mxu0 0.0
    %89 = vmatprep.subr.mxu0 0.0
    %90 = vmatpush1.msra.mxu0 0.0
    %91 = vmatprep.subr.mxu0 0.0
    %92 = vmatpush1.msra.mxu0 0.0
    %93 = vmatprep.subr.mxu0 0.0
    %94 = vmatpush1.msra.mxu0 0.0
    %95 = vmatprep.subr.mxu0 0.0
    %96 = vmatpush1.msra.mxu0 0.0
    %97 = vmatprep.subr.mxu0 0.0
    %98 = vmatpush1.msra.mxu0 0.0
    %99 = vmatprep.subr.mxu0 0.0
    %100 = vmatpush1.msra.mxu0 0.0
    %101 = vmatprep.subr.mxu0 0.0
    %102 = vmatpush1.msra.mxu0 0.0
    %103 = vmatprep.subr.mxu0 0.0
    %104 = vmatpush1.msra.mxu0 0.0
    %105 = vmatprep.subr.mxu0 0.0
    %106 = vmatpush1.msra.mxu0 0.0
    %107 = vmatprep.subr.mxu0 0.0
    %108 = vmatpush1.msra.mxu0 0.0
    %109 = vmatprep.subr.mxu0 0.0
    %110 = vmatpush1.msra.mxu0 0.0
    %111 = vmatprep.subr.mxu0 0.0
    %112 = vmatpush1.msra.mxu0 0.0
    %113 = vmatprep.subr.mxu0 0.0
    %114 = vmatpush1.msra.mxu0 0.0
    %115 = vmatprep.subr.mxu0 0.0
    %116 = vmatpush1.msra.mxu0 0.0
    %117 = vmatprep.subr.mxu0 0.0
    %118 = vmatpush1.msra.mxu0 0.0
    %119 = vmatprep.subr.mxu0 0.0
    %120 = vmatpush1.msra.mxu0 0.0
    %121 = vmatprep.subr.mxu0 0.0
    %122 = vmatpush1.msra.mxu0 0.0
    %123 = vmatprep.subr.mxu0 0.0
    %124 = vmatpush1.msra.mxu0 0.0
    %125 = vmatprep.subr.mxu0 0.0
    %126 = vmatpush1.msra.mxu0 0.0
    %127 = vmatprep.subr.mxu0 0.0
    %128 = vmatpush1.msra.mxu0 0.0
    %129 = vmatprep.subr.mxu0 0.0
    %130 = vmatpush1.msra.mxu0 0.0
    %131 = vmatprep.subr.mxu0 0.0
    %132 = vmatpush1.msra.mxu0 0.0
    %133 = vmatprep.subr.mxu0 0.0
    %134 = vmatpush1.msra.mxu0 0.0
    %135 = vmatprep.subr.mxu0 0.0
    %136 = vmatpush1.msra.mxu0 0.0
    %137 = vmatprep.subr.mxu0 0.0
    %138 = vmatpush1.msra.mxu0 0.0
    %139 = vmatprep.subr.mxu0 0.0
    %140 = vmatpush1.msra.mxu0 0.0
    %141 = vmatprep.mubr.f32.mxu0 0.0
    %142 = vmatmul.mubr.f32.gmra.mrb[0].mxu0 %v66
    %v143 = vpop.f32.mrb[0].mxu0
    %v144 = vadd.f32 %v60, %v143
    %v145 = vpop.f32.mrb[0].mxu0
    %146 = vmatprep.mubr.f32.mxu0 0.0
    %147 = vmatmul.mubr.f32.gmra.mrb[0].mxu0 %v69
    %v148 = vpop.f32.mrb[0].mxu0
    %v149 = vadd.f32 %v61, %v148
    %v150 = vpop.f32.mrb[0].mxu0
    %151 = vmatprep.mubr.f32.mxu0 0.0
    %152 = vmatmul.mubr.f32.gmra.mrb[0].mxu0 %v72
    %v153 = vpop.f32.mrb[0].mxu0
    %v154 = vadd.f32 %v62, %v153
    %v155 = vpop.f32.mrb[0].mxu0
    %156 = vmatprep.mubr.f32.mxu0 0.0
    %157 = vmatmul.mubr.f32.gmra.mrb[0].mxu0 %v75
    %v158 = vpop.f32.mrb[0].mxu0
    %v159 = vadd.f32 %v63, %v158
    %v160 = vpop.f32.mrb[0].mxu0
    %161 = vdwg.mxu0
    %v162 = vlaneseq
    %v163 = vshrl.u32 %v162, 7
    %v164 = vsub.s32 0, %v163
    %v165 = vrot.slane %v30, %v164
    %v166 = vadd.f32 %v144, %v165
    %v167 = vadd.f32 %v149, %v165
    %v168 = vadd.f32 %v154, %v165
    %v169 = vadd.f32 %v159, %v165
    %v170 = vld [vmem:[%s2] sm:$0xff]
    %v171 = vld [vmem:[%s2 + $0x8] sm:$0xff]
    %v172 = vld [vmem:[%s2 + $0x10] sm:$0xff]
    %v173 = vld [vmem:[%s2 + $0x18] sm:$0xff]
    %v174 = vlaneseq
    %v175 = vshrl.u32 %v174, 7
    %v176 = vsub.s32 0, %v175
    %v177 = vrot.slane %v31, %v176
    %v179 = vsel %vm64, %v170, 0
    %v182 = vsel %vm64, %v171, 0
    %v185 = vsel %vm64, %v172, 0
    %v188 = vsel %vm64, %v173, 0
    %190 = vmatprep.subr.mxu0 0.0
    %191 = vmatpush1.msra.mxu0 %v166
    %192 = vmatprep.subr.mxu0 0.0
    %193 = vmatpush1.msra.mxu0 %v167
    %194 = vmatprep.subr.mxu0 0.0
    %195 = vmatpush1.msra.mxu0 %v168
    %196 = vmatprep.subr.mxu0 0.0
    %197 = vmatpush1.msra.mxu0 %v169
    %198 = vmatprep.subr.mxu0 0.0
    %199 = vmatpush1.msra.mxu0 0.0
    %200 = vmatprep.subr.mxu0 0.0
    %201 = vmatpush1.msra.mxu0 0.0
    %202 = vmatprep.subr.mxu0 0.0
    %203 = vmatpush1.msra.mxu0 0.0
    %204 = vmatprep.subr.mxu0 0.0
    %205 = vmatpush1.msra.mxu0 0.0
    %206 = vmatprep.subr.mxu0 0.0
    %207 = vmatpush1.msra.mxu0 0.0
    %208 = vmatprep.subr.mxu0 0.0
    %209 = vmatpush1.msra.mxu0 0.0
    %210 = vmatprep.subr.mxu0 0.0
    %211 = vmatpush1.msra.mxu0 0.0
    %212 = vmatprep.subr.mxu0 0.0
    %213 = vmatpush1.msra.mxu0 0.0
    %214 = vmatprep.subr.mxu0 0.0
    %215 = vmatpush1.msra.mxu0 0.0
    %216 = vmatprep.subr.mxu0 0.0
    %217 = vmatpush1.msra.mxu0 0.0
    %218 = vmatprep.subr.mxu0 0.0
    %219 = vmatpush1.msra.mxu0 0.0
    %220 = vmatprep.subr.mxu0 0.0
    %221 = vmatpush1.msra.mxu0 0.0
    %222 = vmatprep.subr.mxu0 0.0
    %223 = vmatpush1.msra.mxu0 0.0
    %224 = vmatprep.subr.mxu0 0.0
    %225 = vmatpush1.msra.mxu0 0.0
    %226 = vmatprep.subr.mxu0 0.0
    %227 = vmatpush1.msra.mxu0 0.0
    %228 = vmatprep.subr.mxu0 0.0
    %229 = vmatpush1.msra.mxu0 0.0
    %230 = vmatprep.subr.mxu0 0.0
    %231 = vmatpush1.msra.mxu0 0.0
    %232 = vmatprep.subr.mxu0 0.0
    %233 = vmatpush1.msra.mxu0 0.0
    %234 = vmatprep.subr.mxu0 0.0
    %235 = vmatpush1.msra.mxu0 0.0
    %236 = vmatprep.subr.mxu0 0.0
    %237 = vmatpush1.msra.mxu0 0.0
    %238 = vmatprep.subr.mxu0 0.0
    %239 = vmatpush1.msra.mxu0 0.0
    %240 = vmatprep.subr.mxu0 0.0
    %241 = vmatpush1.msra.mxu0 0.0
    %242 = vmatprep.subr.mxu0 0.0
    %243 = vmatpush1.msra.mxu0 0.0
    %244 = vmatprep.subr.mxu0 0.0
    %245 = vmatpush1.msra.mxu0 0.0
    %246 = vmatprep.subr.mxu0 0.0
    %247 = vmatpush1.msra.mxu0 0.0
    %248 = vmatprep.subr.mxu0 0.0
    %249 = vmatpush1.msra.mxu0 0.0
    %250 = vmatprep.subr.mxu0 0.0
    %251 = vmatpush1.msra.mxu0 0.0
    %252 = vmatprep.subr.mxu0 0.0
    %253 = vmatpush1.msra.mxu0 0.0
    %254 = vmatprep.mubr.f32.mxu0 0.0
    %255 = vmatmul.mubr.f32.gmra.mrb[0].mxu0 %v179
    %v256 = vpop.f32.mrb[0].mxu0
    %v257 = vadd.f32 %v177, %v256
    %v258 = vpop.f32.mrb[0].mxu0
    %259 = vmatprep.mubr.f32.mxu0 0.0
    %260 = vmatmul.mubr.f32.gmra.mrb[0].mxu0 %v182
    %v261 = vpop.f32.mrb[0].mxu0
    %v262 = vadd.f32 %v177, %v261
    %v263 = vpop.f32.mrb[0].mxu0
    %264 = vmatprep.mubr.f32.mxu0 0.0
    %265 = vmatmul.mubr.f32.gmra.mrb[0].mxu0 %v185
    %v266 = vpop.f32.mrb[0].mxu0
    %v267 = vadd.f32 %v177, %v266
    %v268 = vpop.f32.mrb[0].mxu0
    %269 = vmatprep.mubr.f32.mxu0 0.0
    %270 = vmatmul.mubr.f32.gmra.mrb[0].mxu0 %v188
    %v271 = vpop.f32.mrb[0].mxu0
    %v272 = vadd.f32 %v177, %v271
    %v273 = vpop.f32.mrb[0].mxu0
    %274 = vdwg.mxu0
    %279 = vrot.lane.b32.xlu0 %v166, 96
    %v280 = vpop.permute.xlu0 %279
    %281 = vrot.lane.b32.xlu0 %v167, 96
    %v282 = vpop.permute.xlu0 %281
    %283 = vrot.lane.b32.xlu0 %v168, 96
    %v284 = vpop.permute.xlu0 %283
    %285 = vrot.lane.b32.xlu0 %v169, 96
    %v286 = vpop.permute.xlu0 %285
    %v291 = vadd.f32 %v257, %v280
    %v292 = vadd.f32 %v262, %v282
    %v293 = vadd.f32 %v267, %v284
    %v294 = vadd.f32 %v272, %v286
    %v295 = vxor.u32 %v291, 2147483648
    %v296 = vxor.u32 %v292, 2147483648
    %v297 = vxor.u32 %v293, 2147483648
    %v298 = vxor.u32 %v294, 2147483648
    %v299 = vmul.f32 %v295, 1.442695
    %v300 = vpow.pop %v299
    %v301 = vmul.f32 %v296, 1.442695
    %v302 = vpow.pop %v301
    %v303 = vmul.f32 %v297, 1.442695
    %v304 = vpow.pop %v303
    %v305 = vmul.f32 %v298, 1.442695
    %v306 = vpow.pop %v305
    %v307 = vadd.f32 %v300, 1.0
    %v308 = vadd.f32 %v302, 1.0
    %v309 = vadd.f32 %v304, 1.0
    %v310 = vadd.f32 %v306, 1.0
    %v311 = vrcp.pop %v307
    %v312 = vmul.f32 1.0, %v311
    %v313 = vrcp.pop %v308
    %v314 = vmul.f32 1.0, %v313
    %v315 = vrcp.pop %v309
    %v316 = vmul.f32 1.0, %v315
    %v317 = vrcp.pop %v310
    %v318 = vmul.f32 1.0, %v317
    %319 = vrot.lane.b32.xlu0 %v166, 64
    %v320 = vpop.permute.xlu0 %319
    %321 = vrot.lane.b32.xlu0 %v167, 64
    %v322 = vpop.permute.xlu0 %321
    %323 = vrot.lane.b32.xlu0 %v168, 64
    %v324 = vpop.permute.xlu0 %323
    %325 = vrot.lane.b32.xlu0 %v169, 64
    %v326 = vpop.permute.xlu0 %325
    %v331 = vadd.f32 %v257, %v320
    %v332 = vadd.f32 %v262, %v322
    %v333 = vadd.f32 %v267, %v324
    %v334 = vadd.f32 %v272, %v326
    %v335 = vxor.u32 %v331, 2147483648
    %v336 = vxor.u32 %v332, 2147483648
    %v337 = vxor.u32 %v333, 2147483648
    %v338 = vxor.u32 %v334, 2147483648
    %v339 = vmul.f32 %v335, 1.442695
    %v340 = vpow.pop %v339
    %v341 = vmul.f32 %v336, 1.442695
    %v342 = vpow.pop %v341
    %v343 = vmul.f32 %v337, 1.442695
    %v344 = vpow.pop %v343
    %v345 = vmul.f32 %v338, 1.442695
    %v346 = vpow.pop %v345
    %v347 = vadd.f32 %v340, 1.0
    %v348 = vadd.f32 %v342, 1.0
    %v349 = vadd.f32 %v344, 1.0
    %v350 = vadd.f32 %v346, 1.0
    %v351 = vrcp.pop %v347
    %v352 = vmul.f32 1.0, %v351
    %v353 = vrcp.pop %v348
    %v354 = vmul.f32 1.0, %v353
    %v355 = vrcp.pop %v349
    %v356 = vmul.f32 1.0, %v355
    %v357 = vrcp.pop %v350
    %v358 = vmul.f32 1.0, %v357
    %359 = vrot.lane.b32.xlu0 %v166, 32
    %v360 = vpop.permute.xlu0 %359
    %361 = vrot.lane.b32.xlu0 %v167, 32
    %v362 = vpop.permute.xlu0 %361
    %363 = vrot.lane.b32.xlu0 %v168, 32
    %v364 = vpop.permute.xlu0 %363
    %365 = vrot.lane.b32.xlu0 %v169, 32
    %v366 = vpop.permute.xlu0 %365
    %v371 = vmul.f32 %v312, %v360
    %v372 = vmul.f32 %v314, %v362
    %v373 = vmul.f32 %v316, %v364
    %v374 = vmul.f32 %v318, %v366
    %v375 = vadd.f32 %v257, %v371
    %v376 = vadd.f32 %v262, %v372
    %v377 = vadd.f32 %v267, %v373
    %v378 = vadd.f32 %v272, %v374
    %v379 = vtanh.pop %v375
    %v380 = vtanh.pop %v376
    %v381 = vtanh.pop %v377
    %v382 = vtanh.pop %v378
    %v383 = vsub.f32 1.0, %v352
    %v384 = vsub.f32 1.0, %v354
    %v385 = vsub.f32 1.0, %v356
    %v386 = vsub.f32 1.0, %v358
    %v387 = vmul.f32 %v383, %v379
    %v388 = vmul.f32 %v384, %v380
    %v389 = vmul.f32 %v385, %v381
    %v390 = vmul.f32 %v386, %v382
    %v391 = vmul.f32 %v352, %v21
    %v392 = vmul.f32 %v354, %v22
    %v393 = vmul.f32 %v356, %v23
    %v394 = vmul.f32 %v358, %v24
    %v395 = vadd.f32 %v387, %v391
    %v396 = vadd.f32 %v388, %v392
    %v397 = vadd.f32 %v389, %v393
    %v398 = vadd.f32 %v390, %v394
    %399 = vst.msk [vmem:[#allocation2] sm:$0xff] %vm64, %v395
    %400 = vst.msk [vmem:[#allocation2 + $0x8] sm:$0xff] %vm64, %v396
    %401 = vst.msk [vmem:[#allocation2 + $0x10] sm:$0xff] %vm64, %v397
    %402 = vst.msk [vmem:[#allocation2 + $0x18] sm:$0xff] %vm64, %v398
    // Predicated region
    $region22: #{_att_gru_step.1} parent=1 // pred_check
      _
    $region23: #{_att_gru_step.1} parent=1 // pred_check_branch
      %404 = sbr.rel (0) target = $region25
    $region24: #{_att_gru_step.1} parent=1 // pred_region
      %s406 = ssub.s32 512, 512
      %407 = vsyncadd [#allocation3], %s406
      %s408 = sshll.u32 [#allocation2], 4
      %s409 = int_to_ptr.vmem [resolvable:$true] %s408
      %414 = dma.vmem_to_hbm [thread:$0]  %s409, 512, %s5, [#allocation3], 128, 128, 8
    $region25: #{_att_gru_step.1} parent=1 // pred_fallthru
      _
    // Predicated region
    $region26: #{_att_gru_step.1} parent=1 // pred_check
      _
    $region27: #{_att_gru_step.1} parent=1 // pred_check_branch
      %416 = sbr.rel (0) target = $region29
    $region28: #{_att_gru_step.1} parent=1 // pred_region
      %417 = dma.done [#allocation3], 512
    $region29: #{_att_gru_step.1} parent=1 // pred_fallthru
      _
    %418 = vsyncpa [#allocation3], 1

</llo_original>
